<compile_context>
chip_gen: v7x
topology: tpu7x:2x2x1
jax: 0.10.0
libtpu: 0.0.40
codegen_flags: <defaults>
</compile_context>

<pallas_src>
import functools

import jax
import jax.numpy as jnp
from jax import lax
from jax.experimental import pallas as pl
from jax.experimental.pallas import tpu as pltpu


def _embeddings_kernel(ids_ref,    # SMEM (B*S,) int32   scalar-prefetched token ids
                       wte_hbm,    # HBM  (V, H) f32     word embedding table (no auto-DMA)
                       pos_ref,    # VMEM (S, H) f32     position rows 0..S-1
                       gamma_ref,  # VMEM (1, H) f32
                       beta_ref,   # VMEM (1, H) f32
                       out_ref,    # VMEM (TR, H) f32    TR = TB * S flattened rows
                       word_buf,   # VMEM (TR, H) f32    gathered word embeddings
                       sem,        # DMA semaphores (TR,)
                       *, seq_len, eps, sublane_aligned):
    bb = pl.program_id(0)
    TR, _ = word_buf.shape
    TB = TR // seq_len
    base = bb * TR                       # flat row offset of this block

    # ---- embedding gather: DMA only the TR needed rows of wte (HBM -> VMEM).
    # Issue every row copy of the block first; they all fly concurrently.
    @pl.loop(0, TR)
    def _issue(r):
        tok = ids_ref[base + r]
        pltpu.make_async_copy(wte_hbm.at[tok], word_buf.at[r], sem.at[r]).start()

    gamma = gamma_ref[...]               # (1, H), hoisted out of the chunk loop
    beta = beta_ref[...]
    pos = pos_ref[...]                   # (S, H)

    # ---- per-sequence chunks: wait only on the S rows of this chunk, then do the
    # add + LayerNorm + store while later chunks' gathers are still in flight.
    @pl.loop(0, TB)
    def _per_seq(t):
        row0 = t * seq_len
        if sublane_aligned:
            row0 = pl.multiple_of(row0, 8)

        @pl.loop(0, seq_len)
        def _wait(s):
            pltpu.make_async_copy(wte_hbm.at[0], word_buf.at[row0 + s],
                                  sem.at[row0 + s]).wait()

        # TODO(synk): detach_qa only stops gradients (.detach()); forward values unchanged.
        x = word_buf[pl.ds(row0, seq_len), :] + pos            # (S, H) f32

        # LayerNorm over hidden dim (biased variance, eps=1e-12), f32 math on VPU.
        mean = jnp.mean(x, axis=-1, keepdims=True)
        xc = x - mean
        var = jnp.mean(xc * xc, axis=-1, keepdims=True)
        inv = lax.rsqrt(var + eps)
        y = xc * inv * gamma + beta

        # TODO(synk): dropout omitted (inference/eval mode -> identity).
        out_ref[pl.ds(row0, seq_len), :] = y.astype(out_ref.dtype)


def dbert_embeddings(input_ids, wte, pte, gamma, beta, *, eps=1e-12, target_rows=256):
    """input_ids: (B, S) int32; wte: (V, H); pte: (P, H) with P >= S; gamma/beta: (H,)."""
    B, S = input_ids.shape
    V, H = wte.shape
    R = B * S

    # Coarse tiling: TB whole batch rows (TR = TB*S flattened rows) per grid step.
    # Small problems collapse to a single grid step; larger ones target ~256 rows.
    TB = max(1, min(B, max(1, target_rows // S)))
    while B % TB != 0:
        TB -= 1
    if (TB * S) % 8 != 0:          # keep sublane dim tile-friendly, else take full array
        TB = B
    TR = TB * S
    grid = (B // TB,)

    ids_flat = input_ids.reshape(R).astype(jnp.int32)
    wte_f = wte.astype(jnp.float32)
    pos = pte[:S].astype(jnp.float32)                      # position_ids = arange(S)
    gamma2 = gamma.reshape(1, H).astype(jnp.float32)
    beta2 = beta.reshape(1, H).astype(jnp.float32)

    kernel = functools.partial(_embeddings_kernel, seq_len=S, eps=eps,
                               sublane_aligned=(S % 8 == 0))
    out_flat = pl.pallas_call(
        kernel,
        out_shape=jax.ShapeDtypeStruct((R, H), jnp.float32),
        grid_spec=pltpu.PrefetchScalarGridSpec(
            num_scalar_prefetch=1,                          # ids -> SMEM
            grid=grid,
            in_specs=[
                pl.BlockSpec(memory_space=pl.ANY),            # wte stays in HBM
                pl.BlockSpec((S, H), lambda b, ids: (0, 0)),  # position rows (resident)
                pl.BlockSpec((1, H), lambda b, ids: (0, 0)),  # gamma
                pl.BlockSpec((1, H), lambda b, ids: (0, 0)),  # beta
            ],
            out_specs=pl.BlockSpec((TR, H), lambda b, ids: (b, 0)),
            scratch_shapes=[
                pltpu.VMEM((TR, H), jnp.float32),           # gathered word embeddings
                pltpu.SemaphoreType.DMA((TR,)),             # one sem per row DMA
            ],
        ),
        compiler_params=pltpu.CompilerParams(
            dimension_semantics=("parallel",)),             # batch blocks independent
    )(ids_flat, wte_f, pos, gamma2, beta2)

    return out_flat.reshape(B, S, H)


def _reference(input_ids, wte, pte, gamma, beta, eps=1e-12):
    S = input_ids.shape[1]
    word = wte[input_ids]                    # (B, S, H)
    pos = pte[:S][None]                      # (1, S, H)
    x = word + pos
    mean = jnp.mean(x, axis=-1, keepdims=True)
    var = jnp.mean((x - mean) ** 2, axis=-1, keepdims=True)
    return (x - mean) / jnp.sqrt(var + eps) * gamma + beta


if __name__ == "__main__":
    # config: vocab_size=64, hidden_size=dim=32, max_position_embeddings=16,
    #         type_vocab_size=2, detach_qa=False, dropout=0.0 (eval)
    B, S, H, V, P = 2, 8, 32, 64, 16

    key = jax.random.PRNGKey(0)
    k_ids, k_wte, k_pte, k_g, k_b = jax.random.split(key, 5)

    input_ids = jax.random.randint(k_ids, (B, S), 0, V, dtype=jnp.int32)
    wte = 0.02 * jax.random.normal(k_wte, (V, H), dtype=jnp.float32)
    wte = wte.at[0].set(0.0)                 # padding_idx=0
    pte = 0.02 * jax.random.normal(k_pte, (P, H), dtype=jnp.float32)
    # non-trivial affine so the gamma/beta path is actually exercised
    gamma = 1.0 + 0.1 * jax.random.normal(k_g, (H,), dtype=jnp.float32)
    beta = 0.1 * jax.random.normal(k_b, (H,), dtype=jnp.float32)

    out = dbert_embeddings(input_ids, wte, pte, gamma, beta)
    out = jax.block_until_ready(out)

    ref = _reference(input_ids, wte, pte, gamma, beta)
    assert out.shape == (B, S, H)
    assert jnp.allclose(out, ref, atol=1e-4, rtol=1e-4)

    print("KERNEL_OK")
</pallas_src>

<mosaic_0001>
module attributes {stable_mosaic.version = 11 : i64} {
  func.func @_embeddings_kernel(%arg0: i32, %arg1: memref<16xi32, #tpu.memory_space<smem>>, %arg2: memref<64x32xf32, #tpu.memory_space<any>>, %arg3: memref<8x32xf32, #tpu.memory_space<vmem>>, %arg4: memref<1x32xf32, #tpu.memory_space<vmem>>, %arg5: memref<1x32xf32, #tpu.memory_space<vmem>>, %arg6: memref<16x32xf32, #tpu.memory_space<vmem>>, %arg7: memref<16x32xf32, #tpu.memory_space<vmem>>, %arg8: memref<16x!tpu.dma_semaphore, #tpu.memory_space<semaphore_mem>>) attributes {dimension_semantics = [#tpu.dimension_semantics<parallel>], iteration_bounds = array<i64: 1>, scalar_prefetch = 1 : i64, scratch_operands = 2 : i64, tpu.core_type = #tpu.core_type<tc>, window_params = [{}, {pipeline_mode = #tpu.pipeline_mode<synchronous>, transform_indices = @transform_1, window_bounds = array<i64: 8, 32>}, {pipeline_mode = #tpu.pipeline_mode<synchronous>, transform_indices = @transform_2, window_bounds = array<i64: 1, 32>}, {pipeline_mode = #tpu.pipeline_mode<synchronous>, transform_indices = @transform_3, window_bounds = array<i64: 1, 32>}, {transform_indices = @transform_4, window_bounds = array<i64: 16, 32>}]} {
    %c16_i32 = arith.constant 16 : i32
    %0 = arith.muli %arg0, %c16_i32 : i32
    %c0_i32 = arith.constant 0 : i32
    %c16_i32_0 = arith.constant 16 : i32
    %1 = arith.addi %c0_i32, %c16_i32_0 : i32
    %c1_i32 = arith.constant 1 : i32
    scf.for %arg9 = %c0_i32 to %1 step %c1_i32  : i32 {
      %c1_i32_10 = arith.constant 1 : i32
      %6 = arith.muli %arg9, %c1_i32_10 : i32
      %c0_i32_11 = arith.constant 0 : i32
      %7 = arith.addi %c0_i32_11, %6 : i32
      %8 = arith.addi %0, %7 : i32
      %9 = arith.index_cast %8 : i32 to index
      %10 = memref.load %arg1[%9] : memref<16xi32, #tpu.memory_space<smem>>
      %c0_i32_12 = arith.constant 0 : i32
      %11 = tpu.memref_slice %arg2[%10, %c0_i32_12] : memref<64x32xf32, #tpu.memory_space<any>> -> memref<1x32xf32, #tpu.memory_space<any>>
      %12 = tpu.memref_squeeze %11 : memref<1x32xf32, #tpu.memory_space<any>> -> memref<32xf32, #tpu.memory_space<any>>
      %c0_i32_13 = arith.constant 0 : i32
      %13 = tpu.memref_slice %arg7[%7, %c0_i32_13] : memref<16x32xf32, #tpu.memory_space<vmem>> -> memref<1x32xf32, #tpu.memory_space<vmem>>
      %14 = tpu.memref_squeeze %13 : memref<1x32xf32, #tpu.memory_space<vmem>> -> memref<32xf32, #tpu.memory_space<vmem>>
      %15 = tpu.memref_slice %arg8[%7] : memref<16x!tpu.dma_semaphore, #tpu.memory_space<semaphore_mem>> -> memref<1x!tpu.dma_semaphore, #tpu.memory_space<semaphore_mem>>
      %16 = tpu.memref_squeeze %15 : memref<1x!tpu.dma_semaphore, #tpu.memory_space<semaphore_mem>> -> memref<!tpu.dma_semaphore, #tpu.memory_space<semaphore_mem>>
      tpu.enqueue_dma source(%12 : memref<32xf32, #tpu.memory_space<any>>) target(%14 : memref<32xf32, #tpu.memory_space<vmem>>) target_semaphore(%16 : memref<!tpu.dma_semaphore, #tpu.memory_space<semaphore_mem>>)
    }
    %c16_i32_1 = arith.constant 16 : i32
    %c0 = arith.constant 0 : index
    %c0_2 = arith.constant 0 : index
    %2 = vector.load %arg4[%c0, %c0_2] : memref<1x32xf32, #tpu.memory_space<vmem>>, vector<1x32xf32>
    %c0_3 = arith.constant 0 : index
    %c0_4 = arith.constant 0 : index
    %3 = vector.load %arg5[%c0_3, %c0_4] : memref<1x32xf32, #tpu.memory_space<vmem>>, vector<1x32xf32>
    %c0_5 = arith.constant 0 : index
    %c0_6 = arith.constant 0 : index
    %4 = vector.load %arg3[%c0_5, %c0_6] : memref<8x32xf32, #tpu.memory_space<vmem>>, vector<8x32xf32>
    %c0_i32_7 = arith.constant 0 : i32
    %c2_i32 = arith.constant 2 : i32
    %5 = arith.addi %c0_i32_7, %c2_i32 : i32
    %c1_i32_8 = arith.constant 1 : i32
    scf.for %arg9 = %c0_i32_7 to %5 step %c1_i32_8  : i32 {
      %c1_i32_10 = arith.constant 1 : i32
      %6 = arith.muli %arg9, %c1_i32_10 : i32
      %c0_i32_11 = arith.constant 0 : i32
      %7 = arith.addi %c0_i32_11, %6 : i32
      %c8_i32 = arith.constant 8 : i32
      %8 = arith.muli %7, %c8_i32 : i32
      %9 = tpu.assume_multiple %8, 8 : i32
      %c0_i32_12 = arith.constant 0 : i32
      %c8_i32_13 = arith.constant 8 : i32
      %10 = arith.addi %c0_i32_12, %c8_i32_13 : i32
      %c1_i32_14 = arith.constant 1 : i32
      scf.for %arg10 = %c0_i32_12 to %10 step %c1_i32_14  : i32 {
        %c1_i32_22 = arith.constant 1 : i32
        %36 = arith.muli %arg10, %c1_i32_22 : i32
        %c0_i32_23 = arith.constant 0 : i32
        %37 = arith.addi %c0_i32_23, %36 : i32
        %38 = arith.addi %9, %37 : i32
        %39 = arith.addi %9, %37 : i32
        %c0_i32_24 = arith.constant 0 : i32
        %c0_i32_25 = arith.constant 0 : i32
        %40 = tpu.memref_slice %arg2[%c0_i32_24, %c0_i32_25] : memref<64x32xf32, #tpu.memory_space<any>> -> memref<1x32xf32, #tpu.memory_space<any>>
        %41 = tpu.memref_squeeze %40 : memref<1x32xf32, #tpu.memory_space<any>> -> memref<32xf32, #tpu.memory_space<any>>
        %c0_i32_26 = arith.constant 0 : i32
        %42 = tpu.memref_slice %arg7[%38, %c0_i32_26] : memref<16x32xf32, #tpu.memory_space<vmem>> -> memref<1x32xf32, #tpu.memory_space<vmem>>
        %43 = tpu.memref_squeeze %42 : memref<1x32xf32, #tpu.memory_space<vmem>> -> memref<32xf32, #tpu.memory_space<vmem>>
        %44 = tpu.memref_slice %arg8[%39] : memref<16x!tpu.dma_semaphore, #tpu.memory_space<semaphore_mem>> -> memref<1x!tpu.dma_semaphore, #tpu.memory_space<semaphore_mem>>
        %45 = tpu.memref_squeeze %44 : memref<1x!tpu.dma_semaphore, #tpu.memory_space<semaphore_mem>> -> memref<!tpu.dma_semaphore, #tpu.memory_space<semaphore_mem>>
        tpu.wait_dma2 semaphore(%45 : memref<!tpu.dma_semaphore, #tpu.memory_space<semaphore_mem>>) src(%41 : memref<32xf32, #tpu.memory_space<any>>) dst(%43 : memref<32xf32, #tpu.memory_space<vmem>>)
      }
      %c8_i32_15 = arith.constant 8 : i32
      %11 = arith.index_cast %9 : i32 to index
      %c0_16 = arith.constant 0 : index
      %12 = vector.load %arg7[%11, %c0_16] : memref<16x32xf32, #tpu.memory_space<vmem>>, vector<8x32xf32>
      %13 = arith.addf %12, %4 : vector<8x32xf32>
      %cst = arith.constant dense<0.000000e+00> : vector<8xf32>
      %14 = vector.multi_reduction <add>, %13, %cst [1] : vector<8x32xf32> to vector<8xf32>
      %15 = vector.shape_cast %14 : vector<8xf32> to vector<8x1xf32>
      %cst_17 = arith.constant 3.200000e+01 : f32
      %16 = vector.broadcast %cst_17 : f32 to vector<8x1xf32>
      %17 = arith.divf %15, %16 : vector<8x1xf32>
      %18 = vector.broadcast %17 : vector<8x1xf32> to vector<8x32xf32>
      %19 = arith.subf %13, %18 : vector<8x32xf32>
      %20 = arith.mulf %19, %19 : vector<8x32xf32>
      %cst_18 = arith.constant dense<0.000000e+00> : vector<8xf32>
      %21 = vector.multi_reduction <add>, %20, %cst_18 [1] : vector<8x32xf32> to vector<8xf32>
      %22 = vector.shape_cast %21 : vector<8xf32> to vector<8x1xf32>
      %cst_19 = arith.constant 3.200000e+01 : f32
      %23 = vector.broadcast %cst_19 : f32 to vector<8x1xf32>
      %24 = arith.divf %22, %23 : vector<8x1xf32>
      %cst_20 = arith.constant 9.99999996E-13 : f32
      %25 = vector.broadcast %cst_20 : f32 to vector<8x1xf32>
      %26 = arith.addf %24, %25 : vector<8x1xf32>
      %27 = math.rsqrt %26 : vector<8x1xf32>
      %28 = vector.broadcast %27 : vector<8x1xf32> to vector<8x32xf32>
      %29 = arith.mulf %19, %28 : vector<8x32xf32>
      %30 = vector.broadcast %2 : vector<1x32xf32> to vector<8x32xf32>
      %31 = arith.mulf %29, %30 : vector<8x32xf32>
      %32 = vector.broadcast %3 : vector<1x32xf32> to vector<8x32xf32>
      %33 = arith.addf %31, %32 : vector<8x32xf32>
      %34 = arith.index_cast %9 : i32 to index
      %c0_21 = arith.constant 0 : index
      %35 = vector.load %arg6[%34, %c0_21] : memref<16x32xf32, #tpu.memory_space<vmem>>, vector<8x32xf32>
      tpu.vector_store %arg6[%34, %c0_21], %33 {strides = array<i32>} : memref<16x32xf32, #tpu.memory_space<vmem>>, vector<8x32xf32>,
    }
    %c2_i32_9 = arith.constant 2 : i32
    return
  }
  func.func @transform_1(%arg0: i32, %arg1: memref<16xi32, #tpu.memory_space<smem>>) -> (i32, i32) {
    %c0_i32 = arith.constant 0 : i32
    %c0_i32_0 = arith.constant 0 : i32
    %c0_i32_1 = arith.constant 0 : i32
    return %c0_i32, %c0_i32_0 : i32, i32
  }
  func.func @transform_2(%arg0: i32, %arg1: memref<16xi32, #tpu.memory_space<smem>>) -> (i32, i32) {
    %c0_i32 = arith.constant 0 : i32
    %c0_i32_0 = arith.constant 0 : i32
    %c0_i32_1 = arith.constant 0 : i32
    return %c0_i32, %c0_i32_0 : i32, i32
  }
  func.func @transform_3(%arg0: i32, %arg1: memref<16xi32, #tpu.memory_space<smem>>) -> (i32, i32) {
    %c0_i32 = arith.constant 0 : i32
    %c0_i32_0 = arith.constant 0 : i32
    %c0_i32_1 = arith.constant 0 : i32
    return %c0_i32, %c0_i32_0 : i32, i32
  }
  func.func @transform_4(%arg0: i32, %arg1: memref<16xi32, #tpu.memory_space<smem>>) -> (i32, i32) {
    %c0_i32 = arith.constant 0 : i32
    %c0_i32_0 = arith.constant 0 : i32
    return %arg0, %c0_i32 : i32, i32
  }
}

</mosaic_0001>

<llo_original>
// kernel: tpu_custom_call.1
$region0: #{tpu_custom_call.1}
  #allocation0 [shape = 'u32[]', space=smem, size = 0x4, offset = 0x4, fixed_abs, tag = 'smem constant byte address 0x4 - core index']
  #allocation1 [shape = 'u32[144,128]{1,0:T(1,128)}', space=vmem, size = 0x12000, scoped, tag = 'internal scratch']
  #allocation2 [shape = 'f32[16,32]{1,0:T(8,128)}', space=vmem, size = 0x2000, scoped, tag = 'scratch operand']
  #allocation3 [shape = 's32[16]{0}', space=sflag, size = 0x40, scoped, tag = 'scratch operand']
  #allocation4 [shape = 's32[1]{0}', space=sflag, size = 0x4, scoped, tag = 'scoped memory for tpu_custom_call.1']
  #allocation5 [shape = 'u8[512]{0}', space=smem, size = 0x200, scoped, tag = 'prefetched SMEM operand 0']
  #allocation8 [shape = 's32[]', space=sflag, size = 0x4, offset = 0, fixed_abs, tag = 'sflag constant byte address 0x0 - dummy sync flag']
  %s0 = inlined_call_operand.vmem [shape: s32[16], index: 0, kind: input, shape index: {}]
  %s1 = inlined_call_operand.vmem [shape: f32[64,32], index: 1, kind: input, shape index: {}]
  %s2 = inlined_call_operand.vmem [shape: f32[8,32], index: 2, kind: input, shape index: {}]
  %s3 = inlined_call_operand.vmem [shape: f32[1,32], index: 3, kind: input, shape index: {}]
  %s4 = inlined_call_operand.vmem [shape: f32[1,32], index: 4, kind: input, shape index: {}]
  %s5 = inlined_call_operand.hbm [shape: f32[16,32], index: 5, kind: output, shape index: {}]
  %s6 = sld [smem:[#allocation0]]
  $region73: #{tpu_custom_call.1} parent=0
    _
  %s8 = ssub.s32 1, %s6
  %s9 = scalar_select 0, %s8, %s6
  %s10 = sshll.u32 %s0, 4
  %s11 = int_to_ptr.vmem [resolvable:$true] %s10
  %13 = dma.vmem_to_smem %s11, 16, [#allocation5], [#allocation4]
  %14 = dma.done [#allocation4], 16
  %15 = sfence
  $region1: #{tpu_custom_call.1} parent=0
    #allocation6 [shape = 'u8[8192]{0}', space=vmem, size = 0x2000, scoped, tag = 'output window, operand 0, single buffered']
    #allocation7 [shape = 's32[1]{0}', space=sflag, size = 0x4, scoped, tag = 'scoped memory for tpu_custom_call.1']
    %16 = vsyncpa [#allocation7], 0
    // Predicated region
    $region2: #{tpu_custom_call.1} parent=1 // pred_check
      _
    $region3: #{tpu_custom_call.1} parent=1 // pred_check_branch
      %18 = sbr.rel (0) target = $region5
    $region4: #{tpu_custom_call.1} parent=1 // pred_region
      _
    $region5: #{tpu_custom_call.1} parent=1 // pred_fallthru
      _
    // Predicated region
    $region6: #{tpu_custom_call.1} parent=1 // pred_check
      _
    $region7: #{tpu_custom_call.1} parent=1 // pred_check_branch
      %20 = sbr.rel (0) target = $region9
    $region8: #{tpu_custom_call.1} parent=1 // pred_region
      _
    $region9: #{tpu_custom_call.1} parent=1 // pred_fallthru
      _
    // Predicated region
    $region10: #{tpu_custom_call.1} parent=1 // pred_check
      _
    $region11: #{tpu_custom_call.1} parent=1 // pred_check_branch
      %22 = sbr.rel (0) target = $region13
    $region12: #{tpu_custom_call.1} parent=1 // pred_region
      _
    $region13: #{tpu_custom_call.1} parent=1 // pred_fallthru
      _
    %s23 = smul.u32 0, 16
    loop: start=0, step=1, limit=16
    $region14: #{tpu_custom_call.1} parent=1 // loop_pre_header
      _
    $region15: #{tpu_custom_call.1} parent=1 // loop_header
      %s25 = sphi 0, %s29
      %p26 = scmp.ge.s32.totalorder %s25, 16
    $region16: #{tpu_custom_call.1} parent=1 // loop_header_branch
      %28 = sbr.rel (%p26) target = $region20
    $region17: #{tpu_custom_call.1} parent=1 // loop_body
      %s30 = sadd.s32 %s23, %s25
      %s31 = sld [smem:[#allocation5 + %s30]]
      %s32 = scalar_lea.vmem %s1, %s31
      %s33 = scalar_lea.vmem [#allocation2], %s25
      %s34 = scalar_lea.sflag [#allocation3], %s25
      %p36 = scmp.lt.u32.totalorder 1, 8
      %p37 = pneg %p36
      // Predicated region
      $region21: #{tpu_custom_call.1} parent=17 // pred_check
        _
      $region22: #{tpu_custom_call.1} parent=17 // pred_check_branch
        %39 = sbr.rel (%p36) target = $region24
      $region23: #{tpu_custom_call.1} parent=17 // pred_region
        %s54 = sand.u32 1, 7
        %p55 = scmp.eq.s32.totalorder %s54, 0
        %p56 = pneg %p55
        // Predicated region
        $region36: #{tpu_custom_call.1} parent=23 // pred_check
          _
        $region37: #{tpu_custom_call.1} parent=23 // pred_check_branch
          %58 = sbr.rel (%p55) target = $region39
        $region38: #{tpu_custom_call.1} parent=23 // pred_region
          %s59 = sand.u32 1, 7
          %s60 = ssub.s32 1, %s59
          %s61 = scalar_lea.vmem %s32, %s60
          %s62 = ssub.s32 1, %s59
          %s63 = scalar_lea.vmem %s33, %s62 [#allocation2]
          %s64 = sshllo.u32 0, %s59
          loop: start=0, step=1, limit=1
          $region40: #{tpu_custom_call.1} parent=38 // loop_pre_header
            _
          $region41: #{tpu_custom_call.1} parent=38 // loop_header
            %s66 = sphi 0, %s70
            %p67 = scmp.ge.s32.totalorder %s66, 1
            %s71 = sphi %s61, %s61
            %s72 = sphi %s63, %s63
          $region42: #{tpu_custom_call.1} parent=38 // loop_header_branch
            %69 = sbr.rel (%p67) target = $region46
          $region43: #{tpu_custom_call.1} parent=38 // loop_body
            %v73 = vld [vmem:[%s71] sm:%s64]
            %74 = vst [vmem:[%s72] sm:%s64] %v73
          $region44: #{tpu_custom_call.1} parent=38 // loop_footer
            %s70 = sadd.s32 1, %s66
          $region45: #{tpu_custom_call.1} parent=38 // loop_footer_branch
            %65 = sbr.rel target = $region41
          $region46: #{tpu_custom_call.1} parent=38 // loop_exit
            _
        $region39: #{tpu_custom_call.1} parent=23 // pred_fallthru
          _
      $region24: #{tpu_custom_call.1} parent=17 // pred_fallthru
        _
      // Predicated region
      $region25: #{tpu_custom_call.1} parent=17 // pred_check
        %p40 = pneg %p36
      $region26: #{tpu_custom_call.1} parent=17 // pred_check_branch
        %42 = sbr.rel (%p40) target = $region28
      $region27: #{tpu_custom_call.1} parent=17 // pred_region
        %s43 = sshllo.u32 0, 1
        loop: start=0, step=1, limit=1
        $region29: #{tpu_custom_call.1} parent=27 // loop_pre_header
          _
        $region30: #{tpu_custom_call.1} parent=27 // loop_header
          %s45 = sphi 0, %s49
          %p46 = scmp.ge.s32.totalorder %s45, 1
          %s50 = sphi %s32, %s32
          %s51 = sphi %s33, %s33
        $region31: #{tpu_custom_call.1} parent=27 // loop_header_branch
          %48 = sbr.rel (%p46) target = $region35
        $region32: #{tpu_custom_call.1} parent=27 // loop_body
          %v52 = vld [vmem:[%s50] sm:%s43]
          %53 = vst [vmem:[%s51] sm:%s43] %v52
        $region33: #{tpu_custom_call.1} parent=27 // loop_footer
          %s49 = sadd.s32 1, %s45
        $region34: #{tpu_custom_call.1} parent=27 // loop_footer_branch
          %44 = sbr.rel target = $region30
        $region35: #{tpu_custom_call.1} parent=27 // loop_exit
          _
      $region28: #{tpu_custom_call.1} parent=17 // pred_fallthru
        _
      // Predicated region
      $region47: #{tpu_custom_call.1} parent=17 // pred_check
        _
      $region48: #{tpu_custom_call.1} parent=17 // pred_check_branch
        %77 = sbr.rel (0) target = $region50
      $region49: #{tpu_custom_call.1} parent=17 // pred_region
        %78 = vsyncadd %s34, 16
      $region50: #{tpu_custom_call.1} parent=17 // pred_fallthru
        _
    $region18: #{tpu_custom_call.1} parent=1 // loop_footer
      %s29 = sadd.s32 1, %s25
    $region19: #{tpu_custom_call.1} parent=1 // loop_footer_branch
      %24 = sbr.rel target = $region15
    $region20: #{tpu_custom_call.1} parent=1 // loop_exit
      _
    %v79 = vld [vmem:[%s3] sm:$0x1]
    %v80 = vld [vmem:[%s4] sm:$0x1]
    %v81 = vld [vmem:[%s2] sm:$0xff]
    loop: start=0, step=1, limit=2
    $region51: #{tpu_custom_call.1} parent=1 // loop_pre_header
      _
    $region52: #{tpu_custom_call.1} parent=1 // loop_header
      %s83 = sphi 0, %s87
      %p84 = scmp.ge.s32.totalorder %s83, 2
    $region53: #{tpu_custom_call.1} parent=1 // loop_header_branch
      %86 = sbr.rel (%p84) target = $region57
    $region54: #{tpu_custom_call.1} parent=1 // loop_body
      %s88 = smul.u32 %s83, 8
      loop: start=0, step=1, limit=8
      $region58: #{tpu_custom_call.1} parent=54 // loop_pre_header
        _
      $region59: #{tpu_custom_call.1} parent=54 // loop_header
        %s90 = sphi 0, %s94
        %p91 = scmp.ge.s32.totalorder %s90, 8
      $region60: #{tpu_custom_call.1} parent=54 // loop_header_branch
        %93 = sbr.rel (%p91) target = $region64
      $region61: #{tpu_custom_call.1} parent=54 // loop_body
        %s95 = sadd.s32 %s88, %s90
        %s96 = scalar_lea.sflag [#allocation3], %s95
        %98 = dma.done %s96, 16
      $region62: #{tpu_custom_call.1} parent=54 // loop_footer
        %s94 = sadd.s32 1, %s90
      $region63: #{tpu_custom_call.1} parent=54 // loop_footer_branch
        %89 = sbr.rel target = $region59
      $region64: #{tpu_custom_call.1} parent=54 // loop_exit
        _
      %s99 = scalar_lea.vmem [#allocation2], %s88
      %v100 = vld [vmem:[%s99] sm:$0xff]
      %v101 = vadd.f32 %v100, %v81
      %vm102 = vcmask 261120
      %v103 = vsel %vm102, %v101, 0.0
      %104 = vadd.xlane.f32.xlu0 %v103
      %v105 = vpop.xlane.xlu0 %104
      %v106 = vrcp.pop 32.0
      %v107 = vmul.f32 %v105, %v106
      %v108 = vsub.f32 %v101, %v107
      %v109 = vmul.f32 %v108, %v108
      %v110 = vsel %vm102, %v109, 0.0
      %111 = vadd.xlane.f32.xlu0 %v110
      %v112 = vpop.xlane.xlu0 %111
      %v113 = vmul.f32 %v112, %v106
      %v114 = vadd.f32 %v113, 1e-12
      %v115 = vrsqrt.pop %v114
      %v116 = vmul.f32 %v108, %v115
      %v118 = vlaneseq
      %v119 = vshrl.u32 %v118, 7
      %v120 = vsub.s32 0, %v119
      %v121 = vrot.slane %v79, %v120
      %v123 = vmul.f32 %v116, %v121
      %v125 = vlaneseq
      %v126 = vshrl.u32 %v125, 7
      %v127 = vsub.s32 0, %v126
      %v128 = vrot.slane %v80, %v127
      %v130 = vadd.f32 %v123, %v128
      %s131 = scalar_lea.vmem [#allocation6], %s88
      %132 = vst.msk [vmem:[%s131] sm:$0xff] %vm102, %v130
    $region55: #{tpu_custom_call.1} parent=1 // loop_footer
      %s87 = sadd.s32 1, %s83
    $region56: #{tpu_custom_call.1} parent=1 // loop_footer_branch
      %82 = sbr.rel target = $region52
    $region57: #{tpu_custom_call.1} parent=1 // loop_exit
      _
    // Predicated region
    $region65: #{tpu_custom_call.1} parent=1 // pred_check
      _
    $region66: #{tpu_custom_call.1} parent=1 // pred_check_branch
      %134 = sbr.rel (0) target = $region68
    $region67: #{tpu_custom_call.1} parent=1 // pred_region
      %s136 = ssub.s32 256, 256
      %137 = vsyncadd [#allocation7], %s136
      %s138 = sshll.u32 [#allocation6], 4
      %s139 = int_to_ptr.vmem [resolvable:$true] %s138
      %144 = dma.vmem_to_hbm [thread:$0]  %s139, 256, %s5, [#allocation7], 128, 128, 8
    $region68: #{tpu_custom_call.1} parent=1 // pred_fallthru
      _
    // Predicated region
    $region69: #{tpu_custom_call.1} parent=1 // pred_check
      _
    $region70: #{tpu_custom_call.1} parent=1 // pred_check_branch
      %146 = sbr.rel (0) target = $region72
    $region71: #{tpu_custom_call.1} parent=1 // pred_region
      %147 = dma.done [#allocation7], 256
    $region72: #{tpu_custom_call.1} parent=1 // pred_fallthru
      _
    %148 = vsyncpa [#allocation7], 1
  %149 = vsyncmov [#allocation3]
  %s150 = vpop.sfrf %149
  %p151 = scmp.eq.s32.totalorder %s150, 0
  %p152 = pneg %p151
  %154 = shalt.err (%p152)
  %s155 = scalar_lea.sflag [#allocation3], 1
  %156 = vsyncmov %s155
  %s157 = vpop.sfrf %156
  %p158 = scmp.eq.s32.totalorder %s157, 0
  %p159 = pneg %p158
  %161 = shalt.err (%p159)
  %s162 = scalar_lea.sflag [#allocation3], 2
  %163 = vsyncmov %s162
  %s164 = vpop.sfrf %163
  %p165 = scmp.eq.s32.totalorder %s164, 0
  %p166 = pneg %p165
  %168 = shalt.err (%p166)
  %s169 = scalar_lea.sflag [#allocation3], 3
  %170 = vsyncmov %s169
  %s171 = vpop.sfrf %170
  %p172 = scmp.eq.s32.totalorder %s171, 0
  %p173 = pneg %p172
  %175 = shalt.err (%p173)
  %s176 = scalar_lea.sflag [#allocation3], 4
  %177 = vsyncmov %s176
  %s178 = vpop.sfrf %177
  %p179 = scmp.eq.s32.totalorder %s178, 0
  %p180 = pneg %p179
  %182 = shalt.err (%p180)
  %s183 = scalar_lea.sflag [#allocation3], 5
  %184 = vsyncmov %s183
  %s185 = vpop.sfrf %184
  %p186 = scmp.eq.s32.totalorder %s185, 0
  %p187 = pneg %p186
  %189 = shalt.err (%p187)
  %s190 = scalar_lea.sflag [#allocation3], 6
  %191 = vsyncmov %s190
  %s192 = vpop.sfrf %191
  %p193 = scmp.eq.s32.totalorder %s192, 0
  %p194 = pneg %p193
  %196 = shalt.err (%p194)
  %s197 = scalar_lea.sflag [#allocation3], 7
  %198 = vsyncmov %s197
  %s199 = vpop.sfrf %198
  %p200 = scmp.eq.s32.totalorder %s199, 0
  %p201 = pneg %p200
  %203 = shalt.err (%p201)
  %s204 = scalar_lea.sflag [#allocation3], 8
  %205 = vsyncmov %s204
  %s206 = vpop.sfrf %205
  %p207 = scmp.eq.s32.totalorder %s206, 0
  %p208 = pneg %p207
  %210 = shalt.err (%p208)
  %s211 = scalar_lea.sflag [#allocation3], 9
  %212 = vsyncmov %s211
  %s213 = vpop.sfrf %212
  %p214 = scmp.eq.s32.totalorder %s213, 0
  %p215 = pneg %p214
  %217 = shalt.err (%p215)
  %s218 = scalar_lea.sflag [#allocation3], 10
  %219 = vsyncmov %s218
  %s220 = vpop.sfrf %219
  %p221 = scmp.eq.s32.totalorder %s220, 0
  %p222 = pneg %p221
  %224 = shalt.err (%p222)
  %s225 = scalar_lea.sflag [#allocation3], 11
  %226 = vsyncmov %s225
  %s227 = vpop.sfrf %226
  %p228 = scmp.eq.s32.totalorder %s227, 0
  %p229 = pneg %p228
  %231 = shalt.err (%p229)
  %s232 = scalar_lea.sflag [#allocation3], 12
  %233 = vsyncmov %s232
  %s234 = vpop.sfrf %233
  %p235 = scmp.eq.s32.totalorder %s234, 0
  %p236 = pneg %p235
  %238 = shalt.err (%p236)
  %s239 = scalar_lea.sflag [#allocation3], 13
  %240 = vsyncmov %s239
  %s241 = vpop.sfrf %240
  %p242 = scmp.eq.s32.totalorder %s241, 0
  %p243 = pneg %p242
  %245 = shalt.err (%p243)
  %s246 = scalar_lea.sflag [#allocation3], 14
  %247 = vsyncmov %s246
  %s248 = vpop.sfrf %247
  %p249 = scmp.eq.s32.totalorder %s248, 0
  %p250 = pneg %p249
  %252 = shalt.err (%p250)
  %s253 = scalar_lea.sflag [#allocation3], 15
  %254 = vsyncmov %s253
  %s255 = vpop.sfrf %254
  %p256 = scmp.eq.s32.totalorder %s255, 0
  %p257 = pneg %p256
  %259 = shalt.err (%p257)

</llo_original>
